<compile_context>
chip_gen: v5e
topology: v5e:2x2
jax: 0.10.0
libtpu: 0.0.40
codegen_flags: <defaults>
</compile_context>

<pallas_src>
import jax
import jax.numpy as jnp
from jax.experimental import pallas as pl
from jax.experimental.pallas import tpu as pltpu


def _round_up(x: int, m: int) -> int:
    return ((x + m - 1) // m) * m


# ----------------------------------------------------------------------------
# Pallas kernel: forward MLP + analytic VJP (Hutchinson divergence)
# ----------------------------------------------------------------------------
def _ode_func_kernel(t_ref, y_ref, e_ref,
                     w0f_ref, w0b_ref, wt0_ref, b0_ref,
                     w1f_ref, w1b_ref, wt1_ref, b1_ref,
                     w2f_ref, w2b_ref, wt2_ref, b2_ref,
                     dy_ref, div_ref):
    t = t_ref[0]                       # scalar time (SMEM)
    cdt = w0f_ref.dtype                # forward matmul operand dtype (f32 or bf16)

    # bias + time column folded into one (1, out) vector per layer
    bt0 = b0_ref[...] + t * wt0_ref[...]
    bt1 = b1_ref[...] + t * wt1_ref[...]
    bt2 = b2_ref[...] + t * wt2_ref[...]

    # -------- forward: TimeDerivativeDNN ( x @ Wm^T + t*wt + b, tanh between ) --------
    y = y_ref[...].astype(cdt)                                                   # (TB, D)
    z0 = jnp.dot(y, w0f_ref[...], preferred_element_type=jnp.float32) + bt0
    a1 = jnp.tanh(z0)                                                            # (TB, H) f32
    z1 = jnp.dot(a1.astype(cdt), w1f_ref[...],
                 preferred_element_type=jnp.float32) + bt1
    a2 = jnp.tanh(z1)                                                            # (TB, H) f32
    z2 = jnp.dot(a2.astype(cdt), w2f_ref[...],
                 preferred_element_type=jnp.float32) + bt2                       # (TB, D)
    dy_ref[...] = z2.astype(dy_ref.dtype)

    # -------- backward: analytic vjp wrt y with cotangent e (f32 for accuracy) --------
    e = e_ref[...].astype(jnp.float32)                                           # (TB, D)
    g = jnp.dot(e, w2b_ref[...], preferred_element_type=jnp.float32)             # d/d a2
    g = g * (1.0 - a2 * a2)                                                      # d/d z1
    g = jnp.dot(g, w1b_ref[...], preferred_element_type=jnp.float32)             # d/d a1
    g = g * (1.0 - a1 * a1)                                                      # d/d z0
    g = jnp.dot(g, w0b_ref[...], preferred_element_type=jnp.float32)             # d/d y

    # NOTE: (TB, 1) store is lane-sparse (masked vst); accepted, it is tiny vs dy.
    div_ref[...] = jnp.sum(g * e, axis=-1, keepdims=True).astype(div_ref.dtype)


# ----------------------------------------------------------------------------
# Wrapper (the "module")
# ----------------------------------------------------------------------------
class ApproximateODEFunctionPallas:
    """MLP diffeq with t concatenated to each layer input, 3 layers, Hutchinson div."""

    def __init__(self, event_size: int, hidden: int, key,
                 matmul_dtype=jnp.float32, max_batch_tile: int = 1024):
        self.event_size = d = int(event_size)
        self.hidden = h = int(hidden)
        self.matmul_dtype = matmul_dtype
        self.max_batch_tile = int(max_batch_tile)
        self._n_evals = 0
        self.hutch_noise = None
        self._noise_cache = None        # ((b, d), padded noise) -- padded once per odeint

        ks = jax.random.split(key, 6)

        def init_linear(kw, kb, fan_in, fan_out):
            # torch.nn.Linear default init: U(-1/sqrt(fan_in), 1/sqrt(fan_in))
            bound = 1.0 / (fan_in ** 0.5)
            w = jax.random.uniform(kw, (fan_out, fan_in), jnp.float32, -bound, bound)
            b = jax.random.uniform(kb, (fan_out,), jnp.float32, -bound, bound)
            return w, b

        # torch DiffEqLayer weights have shape (out, in+1): last column is t.
        w0, b0 = init_linear(ks[0], ks[1], d + 1, h)     # (h, d+1)
        w1, b1 = init_linear(ks[2], ks[3], h + 1, h)     # (h, h+1)
        w2, b2 = init_linear(ks[4], ks[5], h + 1, d)     # (d, h+1)

        def split(w, b, in_raw):
            wm = w[:, :in_raw]                            # (out, in)  main block
            wt = w[:, in_raw:]                            # (out, 1)   time column
            wf = wm.T.astype(matmul_dtype)                # (in, out)  forward, MXU-ready
            wb = wm.astype(jnp.float32)                   # (out, in)  backward, kept f32
            return wf, wb, wt.T, b[None, :]               # wt: (1,out), b: (1,out), f32

        w0f, w0b, wt0, b0p = split(w0, b0, d)
        w1f, w1b, wt1, b1p = split(w1, b1, h)
        w2f, w2b, wt2, b2p = split(w2, b2, h)

        self.params = dict(w0f=w0f, w0b=w0b, wt0=wt0, b0=b0p,
                           w1f=w1f, w1b=w1b, wt1=wt1, b1=b1p,
                           w2f=w2f, w2b=w2b, wt2=wt2, b2=b2p)

        # unpadded f32 copies for the pure-JAX autodiff reference
        self._ref_params = dict(
            w0=w0[:, :d].T, wt0=w0[:, d:].T, b0=b0[None, :],
            w1=w1[:, :h].T, wt1=w1[:, h:].T, b1=b1[None, :],
            w2=w2[:, :h].T, wt2=w2[:, h:].T, b2=b2[None, :],
        )

        # VMEM budgeting: single-buffer the (constant-index) weight blocks only
        # when the weights themselves are large (v7x 64 MiB VMEM concern).
        w_bytes = sum(int(v.size) * jnp.dtype(v.dtype).itemsize
                      for v in self.params.values())
        self._single_buffer_weights = w_bytes > (8 << 20)
        nbuf = 1 if self._single_buffer_weights else 2
        self._vmem_limit = int(min(100 << 20, (32 << 20) + nbuf * w_bytes))

        self._forward_jit = jax.jit(self._make_forward_fn())

    # ------------------------------------------------------------------ #
    def regularization(self):
        return jnp.zeros(())

    def before_odeint(self, noise=None):
        self._n_evals = 0
        self.hutch_noise = noise
        self._noise_cache = None

    # pure-JAX reference of the diffeq (used only for verification)
    def _diffeq_ref(self, t, y):
        p = self._ref_params
        hdn = jnp.tanh(y @ p["w0"] + p["b0"] + t * p["wt0"])
        hdn = jnp.tanh(hdn @ p["w1"] + p["b1"] + t * p["wt1"])
        return hdn @ p["w2"] + p["b2"] + t * p["wt2"]

    # ------------------------------------------------------------------ #
    def _tile_config(self, b):
        """Batch tile (multiple of 8) and padded batch size."""
        d, h = self.event_size, self.hidden
        # rough per-row VMEM footprint: double-buffered y/e/dy streams + f32
        # intermediates (lane-padded to >=128 in registers / VMEM spill)
        row_bytes = 4 * (3 * d + 6 * max(d, h, 128))
        cap = max(8, ((16 << 20) // (2 * row_bytes)) // 8 * 8)
        rb = _round_up(b, 8)
        tb = min(self.max_batch_tile, cap, rb)
        if tb == rb and rb >= 16:        # v7x megacore: ensure >= 2 grid steps
            tb = rb // 2
        n_tiles = -(-rb // tb)
        tb = _round_up(-(-rb // n_tiles), 8)   # even tiles, minimal batch padding
        bp = _round_up(b, tb)
        return tb, bp

    # ------------------------------------------------------------------ #
    def _make_forward_fn(self):
        d, h = self.event_size, self.hidden
        single_buf = self._single_buffer_weights
        vmem_limit = self._vmem_limit

        def wspec(shape):
            const = lambda i: (0, 0)     # same block every step -> VMEM-resident weights
            if single_buf:               # only taken when weights are large (>8 MiB)
                return pl.BlockSpec(shape, const, pipeline_mode=pl.Buffered(1))
            return pl.BlockSpec(shape, const)

        def fwd(t, y, e_padded, params):
            b = y.shape[0]
            tb, bp = self._tile_config(b)
            assert y.shape[1] == d and e_padded.shape == (bp, d)

            # batch-pad y to a whole number of tiles (no-op, removed by XLA, when bp == b)
            yp = jnp.pad(y, ((0, bp - b), (0, 0)))
            t_arr = jnp.asarray(t, jnp.float32).reshape((1,))

            tile = lambda i: (i, 0)      # batch-streamed operands

            dy_p, div_p = pl.pallas_call(
                _ode_func_kernel,
                grid=(bp // tb,),
                out_shape=(
                    jax.ShapeDtypeStruct((bp, d), y.dtype),   # dy, caller dtype, unpadded lanes
                    jax.ShapeDtypeStruct((bp, 1), y.dtype),   # divergence
                ),
                in_specs=[
                    pl.BlockSpec(memory_space=pltpu.MemorySpace.SMEM),   # t (scalar)
                    pl.BlockSpec((tb, d), tile),                         # y
                    pl.BlockSpec((tb, d), tile),                         # e
                    wspec((d, h)), wspec((h, d)), wspec((1, h)), wspec((1, h)),  # layer 0
                    wspec((h, h)), wspec((h, h)), wspec((1, h)), wspec((1, h)),  # layer 1
                    wspec((h, d)), wspec((d, h)), wspec((1, d)), wspec((1, d)),  # layer 2
                ],
                out_specs=(
                    pl.BlockSpec((tb, d), tile),
                    pl.BlockSpec((tb, 1), tile),
                ),
                compiler_params=pltpu.CompilerParams(
                    dimension_semantics=("parallel",),
                    vmem_limit_bytes=vmem_limit),
            )(t_arr, yp, e_padded,
              params["w0f"], params["w0b"], params["wt0"], params["b0"],
              params["w1f"], params["w1b"], params["wt1"], params["b1"],
              params["w2f"], params["w2b"], params["wt2"], params["b2"])

            # slice off batch padding (no-op when bp == b); outputs already in y.dtype
            return dy_p[:b], div_p[:b]

        return fwd

    # ------------------------------------------------------------------ #
    def _padded_noise(self, y):
        """Pad the Hutchinson noise once per odeint (it is constant across RHS evals)."""
        b, d = y.shape
        if self._noise_cache is not None and self._noise_cache[0] == (b, d):
            return self._noise_cache[1]
        assert self.hutch_noise.shape == (b, d)
        _, bp = self._tile_config(b)
        e_padded = jnp.pad(self.hutch_noise, ((0, bp - b), (0, 0)))
        self._noise_cache = ((b, d), e_padded)
        return e_padded

    # ------------------------------------------------------------------ #
    def forward(self, t, states):
        assert len(states) >= 2
        y = states[0]
        self._n_evals += 1              # python-side eval counter (matches _n_evals buffer)
        if self.hutch_noise is None:
            # TODO(synk): lazy fallback mirrors torch.randn_like; prefer before_odeint(noise=...)
            self.hutch_noise = jax.random.normal(jax.random.PRNGKey(123), y.shape, y.dtype)
            self._noise_cache = None
        e_padded = self._padded_noise(y)
        dy, divergence = self._forward_jit(jnp.asarray(t, jnp.float32),
                                           y, e_padded, self.params)
        # extra states pass through as zeros (plain-JAX glue, no grads in JAX)
        extras = [jnp.zeros_like(s) for s in states[2:]]
        return tuple([dy, divergence] + extras)


# ----------------------------------------------------------------------------
if __name__ == "__main__":
    batch, event_size, hidden = 8, 16, 32

    key = jax.random.PRNGKey(0)
    k_param, k_y, k_noise = jax.random.split(key, 3)

    y = jax.random.normal(k_y, (batch, event_size), jnp.float32)
    logdet = jnp.zeros((batch, 1), jnp.float32)
    noise = jax.random.normal(k_noise, (batch, event_size), jnp.float32)
    t = jnp.float32(0.3)

    # ---- f32 MXU-operand path: exact check against autodiff reference ----
    func = ApproximateODEFunctionPallas(event_size, hidden, k_param)
    func.before_odeint(noise=noise)
    dy, divergence = func.forward(t, (y, logdet))
    jax.block_until_ready((dy, divergence))

    dy_ref, vjp_fn = jax.vjp(lambda yy: func._diffeq_ref(t, yy), y)
    (g_ref,) = vjp_fn(noise)
    div_ref = jnp.sum(g_ref * noise, axis=-1, keepdims=True)

    assert dy.shape == y.shape and divergence.shape == (batch, 1)
    assert dy.dtype == y.dtype and divergence.dtype == y.dtype
    assert jnp.allclose(dy, dy_ref, atol=1e-5, rtol=1e-5)
    assert jnp.allclose(divergence, div_ref, atol=1e-4, rtol=1e-4)

    # ---- multi-tile grid + batch-padding path (grid of 2 tiles, padded rows) ----
    b2 = 24
    y2 = jax.random.normal(jax.random.PRNGKey(7), (b2, event_size), jnp.float32)
    n2 = jax.random.normal(jax.random.PRNGKey(8), (b2, event_size), jnp.float32)
    func.before_odeint(noise=n2)
    dy2, div2 = func.forward(t, (y2, jnp.zeros((b2, 1), jnp.float32)))
    jax.block_until_ready((dy2, div2))
    dy2_ref, vjp2 = jax.vjp(lambda yy: func._diffeq_ref(t, yy), y2)
    (g2,) = vjp2(n2)
    div2_ref = jnp.sum(g2 * n2, axis=-1, keepdims=True)
    assert dy2.shape == y2.shape and div2.shape == (b2, 1)
    assert jnp.allclose(dy2, dy2_ref, atol=1e-5, rtol=1e-5)
    assert jnp.allclose(div2, div2_ref, atol=1e-4, rtol=1e-4)

    # ---- bf16 forward-operand path (perf config for v6e/v7x); backward stays f32 ----
    func_bf16 = ApproximateODEFunctionPallas(event_size, hidden, k_param,
                                             matmul_dtype=jnp.bfloat16)
    func_bf16.before_odeint(noise=noise)
    dy_b, div_b = func_bf16.forward(t, (y, logdet))
    jax.block_until_ready((dy_b, div_b))
    assert jnp.allclose(dy_b, dy_ref, atol=2e-1, rtol=2e-1)
    assert jnp.allclose(div_b, div_ref, atol=5e-1, rtol=5e-1)

    print("KERNEL_OK")
</pallas_src>

<mosaic_0001>
module attributes {stable_mosaic.version = 11 : i64} {
  func.func @_ode_func_kernel(%arg0: i32, %arg1: memref<1xf32, #tpu.memory_space<smem>>, %arg2: memref<8x16xf32, #tpu.memory_space<vmem>>, %arg3: memref<8x16xf32, #tpu.memory_space<vmem>>, %arg4: memref<16x32xf32, #tpu.memory_space<vmem>>, %arg5: memref<32x16xf32, #tpu.memory_space<vmem>>, %arg6: memref<1x32xf32, #tpu.memory_space<vmem>>, %arg7: memref<1x32xf32, #tpu.memory_space<vmem>>, %arg8: memref<32x32xf32, #tpu.memory_space<vmem>>, %arg9: memref<32x32xf32, #tpu.memory_space<vmem>>, %arg10: memref<1x32xf32, #tpu.memory_space<vmem>>, %arg11: memref<1x32xf32, #tpu.memory_space<vmem>>, %arg12: memref<32x16xf32, #tpu.memory_space<vmem>>, %arg13: memref<16x32xf32, #tpu.memory_space<vmem>>, %arg14: memref<1x16xf32, #tpu.memory_space<vmem>>, %arg15: memref<1x16xf32, #tpu.memory_space<vmem>>, %arg16: memref<8x16xf32, #tpu.memory_space<vmem>>, %arg17: memref<8x1xf32, #tpu.memory_space<vmem>>) attributes {dimension_semantics = [#tpu.dimension_semantics<parallel>], iteration_bounds = array<i64: 1>, scalar_prefetch = 0 : i64, scratch_operands = 0 : i64, tpu.core_type = #tpu.core_type<tc>, window_params = [{transform_indices = @transform_0, window_bounds = array<i64: 1>}, {transform_indices = @transform_1, window_bounds = array<i64: 8, 16>}, {transform_indices = @transform_2, window_bounds = array<i64: 8, 16>}, {pipeline_mode = #tpu.pipeline_mode<synchronous>, transform_indices = @transform_3, window_bounds = array<i64: 16, 32>}, {pipeline_mode = #tpu.pipeline_mode<synchronous>, transform_indices = @transform_4, window_bounds = array<i64: 32, 16>}, {pipeline_mode = #tpu.pipeline_mode<synchronous>, transform_indices = @transform_5, window_bounds = array<i64: 1, 32>}, {pipeline_mode = #tpu.pipeline_mode<synchronous>, transform_indices = @transform_6, window_bounds = array<i64: 1, 32>}, {pipeline_mode = #tpu.pipeline_mode<synchronous>, transform_indices = @transform_7, window_bounds = array<i64: 32, 32>}, {pipeline_mode = #tpu.pipeline_mode<synchronous>, transform_indices = @transform_8, window_bounds = array<i64: 32, 32>}, {pipeline_mode = #tpu.pipeline_mode<synchronous>, transform_indices = @transform_9, window_bounds = array<i64: 1, 32>}, {pipeline_mode = #tpu.pipeline_mode<synchronous>, transform_indices = @transform_10, window_bounds = array<i64: 1, 32>}, {pipeline_mode = #tpu.pipeline_mode<synchronous>, transform_indices = @transform_11, window_bounds = array<i64: 32, 16>}, {pipeline_mode = #tpu.pipeline_mode<synchronous>, transform_indices = @transform_12, window_bounds = array<i64: 16, 32>}, {pipeline_mode = #tpu.pipeline_mode<synchronous>, transform_indices = @transform_13, window_bounds = array<i64: 1, 16>}, {pipeline_mode = #tpu.pipeline_mode<synchronous>, transform_indices = @transform_14, window_bounds = array<i64: 1, 16>}, {transform_indices = @transform_15, window_bounds = array<i64: 8, 16>}, {transform_indices = @transform_16, window_bounds = array<i64: 8, 1>}]} {
    %c0 = arith.constant 0 : index
    %0 = memref.load %arg1[%c0] : memref<1xf32, #tpu.memory_space<smem>>
    %c0_0 = arith.constant 0 : index
    %c0_1 = arith.constant 0 : index
    %1 = vector.load %arg7[%c0_0, %c0_1] : memref<1x32xf32, #tpu.memory_space<vmem>>, vector<1x32xf32>
    %c0_2 = arith.constant 0 : index
    %c0_3 = arith.constant 0 : index
    %2 = vector.load %arg6[%c0_2, %c0_3] : memref<1x32xf32, #tpu.memory_space<vmem>>, vector<1x32xf32>
    %3 = vector.broadcast %0 : f32 to vector<1x32xf32>
    %4 = arith.mulf %3, %2 : vector<1x32xf32>
    %5 = arith.addf %1, %4 : vector<1x32xf32>
    %c0_4 = arith.constant 0 : index
    %c0_5 = arith.constant 0 : index
    %6 = vector.load %arg11[%c0_4, %c0_5] : memref<1x32xf32, #tpu.memory_space<vmem>>, vector<1x32xf32>
    %c0_6 = arith.constant 0 : index
    %c0_7 = arith.constant 0 : index
    %7 = vector.load %arg10[%c0_6, %c0_7] : memref<1x32xf32, #tpu.memory_space<vmem>>, vector<1x32xf32>
    %8 = vector.broadcast %0 : f32 to vector<1x32xf32>
    %9 = arith.mulf %8, %7 : vector<1x32xf32>
    %10 = arith.addf %6, %9 : vector<1x32xf32>
    %c0_8 = arith.constant 0 : index
    %c0_9 = arith.constant 0 : index
    %11 = vector.load %arg15[%c0_8, %c0_9] : memref<1x16xf32, #tpu.memory_space<vmem>>, vector<1x16xf32>
    %c0_10 = arith.constant 0 : index
    %c0_11 = arith.constant 0 : index
    %12 = vector.load %arg14[%c0_10, %c0_11] : memref<1x16xf32, #tpu.memory_space<vmem>>, vector<1x16xf32>
    %13 = vector.broadcast %0 : f32 to vector<1x16xf32>
    %14 = arith.mulf %13, %12 : vector<1x16xf32>
    %15 = arith.addf %11, %14 : vector<1x16xf32>
    %c0_12 = arith.constant 0 : index
    %c0_13 = arith.constant 0 : index
    %16 = vector.load %arg2[%c0_12, %c0_13] : memref<8x16xf32, #tpu.memory_space<vmem>>, vector<8x16xf32>
    %c0_14 = arith.constant 0 : index
    %c0_15 = arith.constant 0 : index
    %17 = vector.load %arg4[%c0_14, %c0_15] : memref<16x32xf32, #tpu.memory_space<vmem>>, vector<16x32xf32>
    %cst = arith.constant dense<0.000000e+00> : vector<8x32xf32>
    %18 = tpu.matmul %16, %17, %cst {dimension_numbers = #tpu.dot_dimension_numbers<[1], [0], [0], [1], [0, 0, 1, 1], [], []>} : vector<8x16xf32>, vector<16x32xf32>, vector<8x32xf32> -> vector<8x32xf32>
    %19 = vector.broadcast %5 : vector<1x32xf32> to vector<8x32xf32>
    %20 = arith.addf %18, %19 : vector<8x32xf32>
    %21 = math.tanh %20 : vector<8x32xf32>
    %c0_16 = arith.constant 0 : index
    %c0_17 = arith.constant 0 : index
    %22 = vector.load %arg8[%c0_16, %c0_17] : memref<32x32xf32, #tpu.memory_space<vmem>>, vector<32x32xf32>
    %cst_18 = arith.constant dense<0.000000e+00> : vector<8x32xf32>
    %23 = tpu.matmul %21, %22, %cst_18 {dimension_numbers = #tpu.dot_dimension_numbers<[1], [0], [0], [1], [0, 0, 1, 1], [], []>} : vector<8x32xf32>, vector<32x32xf32>, vector<8x32xf32> -> vector<8x32xf32>
    %24 = vector.broadcast %10 : vector<1x32xf32> to vector<8x32xf32>
    %25 = arith.addf %23, %24 : vector<8x32xf32>
    %26 = math.tanh %25 : vector<8x32xf32>
    %c0_19 = arith.constant 0 : index
    %c0_20 = arith.constant 0 : index
    %27 = vector.load %arg12[%c0_19, %c0_20] : memref<32x16xf32, #tpu.memory_space<vmem>>, vector<32x16xf32>
    %cst_21 = arith.constant dense<0.000000e+00> : vector<8x16xf32>
    %28 = tpu.matmul %26, %27, %cst_21 {dimension_numbers = #tpu.dot_dimension_numbers<[1], [0], [0], [1], [0, 0, 1, 1], [], []>} : vector<8x32xf32>, vector<32x16xf32>, vector<8x16xf32> -> vector<8x16xf32>
    %29 = vector.broadcast %15 : vector<1x16xf32> to vector<8x16xf32>
    %30 = arith.addf %28, %29 : vector<8x16xf32>
    %c0_22 = arith.constant 0 : index
    %c0_23 = arith.constant 0 : index
    %31 = vector.load %arg16[%c0_22, %c0_23] : memref<8x16xf32, #tpu.memory_space<vmem>>, vector<8x16xf32>
    tpu.vector_store %arg16[%c0_22, %c0_23], %30 {strides = array<i32>} : memref<8x16xf32, #tpu.memory_space<vmem>>, vector<8x16xf32>,
    %c0_24 = arith.constant 0 : index
    %c0_25 = arith.constant 0 : index
    %32 = vector.load %arg3[%c0_24, %c0_25] : memref<8x16xf32, #tpu.memory_space<vmem>>, vector<8x16xf32>
    %c0_26 = arith.constant 0 : index
    %c0_27 = arith.constant 0 : index
    %33 = vector.load %arg13[%c0_26, %c0_27] : memref<16x32xf32, #tpu.memory_space<vmem>>, vector<16x32xf32>
    %cst_28 = arith.constant dense<0.000000e+00> : vector<8x32xf32>
    %34 = tpu.matmul %32, %33, %cst_28 {dimension_numbers = #tpu.dot_dimension_numbers<[1], [0], [0], [1], [0, 0, 1, 1], [], []>} : vector<8x16xf32>, vector<16x32xf32>, vector<8x32xf32> -> vector<8x32xf32>
    %35 = arith.mulf %26, %26 : vector<8x32xf32>
    %cst_29 = arith.constant 1.000000e+00 : f32
    %36 = vector.broadcast %cst_29 : f32 to vector<8x32xf32>
    %37 = arith.subf %36, %35 : vector<8x32xf32>
    %38 = arith.mulf %34, %37 : vector<8x32xf32>
    %c0_30 = arith.constant 0 : index
    %c0_31 = arith.constant 0 : index
    %39 = vector.load %arg9[%c0_30, %c0_31] : memref<32x32xf32, #tpu.memory_space<vmem>>, vector<32x32xf32>
    %cst_32 = arith.constant dense<0.000000e+00> : vector<8x32xf32>
    %40 = tpu.matmul %38, %39, %cst_32 {dimension_numbers = #tpu.dot_dimension_numbers<[1], [0], [0], [1], [0, 0, 1, 1], [], []>} : vector<8x32xf32>, vector<32x32xf32>, vector<8x32xf32> -> vector<8x32xf32>
    %41 = arith.mulf %21, %21 : vector<8x32xf32>
    %cst_33 = arith.constant 1.000000e+00 : f32
    %42 = vector.broadcast %cst_33 : f32 to vector<8x32xf32>
    %43 = arith.subf %42, %41 : vector<8x32xf32>
    %44 = arith.mulf %40, %43 : vector<8x32xf32>
    %c0_34 = arith.constant 0 : index
    %c0_35 = arith.constant 0 : index
    %45 = vector.load %arg5[%c0_34, %c0_35] : memref<32x16xf32, #tpu.memory_space<vmem>>, vector<32x16xf32>
    %cst_36 = arith.constant dense<0.000000e+00> : vector<8x16xf32>
    %46 = tpu.matmul %44, %45, %cst_36 {dimension_numbers = #tpu.dot_dimension_numbers<[1], [0], [0], [1], [0, 0, 1, 1], [], []>} : vector<8x32xf32>, vector<32x16xf32>, vector<8x16xf32> -> vector<8x16xf32>
    %47 = arith.mulf %46, %32 : vector<8x16xf32>
    %cst_37 = arith.constant dense<0.000000e+00> : vector<8xf32>
    %48 = vector.multi_reduction <add>, %47, %cst_37 [1] : vector<8x16xf32> to vector<8xf32>
    %49 = vector.shape_cast %48 : vector<8xf32> to vector<8x1xf32>
    %c0_38 = arith.constant 0 : index
    %c0_39 = arith.constant 0 : index
    %50 = vector.load %arg17[%c0_38, %c0_39] : memref<8x1xf32, #tpu.memory_space<vmem>>, vector<8x1xf32>
    tpu.vector_store %arg17[%c0_38, %c0_39], %49 {strides = array<i32>} : memref<8x1xf32, #tpu.memory_space<vmem>>, vector<8x1xf32>,
    return
  }
  func.func @transform_0(%arg0: i32) -> i32 {
    %c0_i32 = arith.constant 0 : i32
    %c0_i32_0 = arith.constant 0 : i32
    return %c0_i32 : i32
  }
  func.func @transform_1(%arg0: i32) -> (i32, i32) {
    %c0_i32 = arith.constant 0 : i32
    %c0_i32_0 = arith.constant 0 : i32
    return %arg0, %c0_i32 : i32, i32
  }
  func.func @transform_2(%arg0: i32) -> (i32, i32) {
    %c0_i32 = arith.constant 0 : i32
    %c0_i32_0 = arith.constant 0 : i32
    return %arg0, %c0_i32 : i32, i32
  }
  func.func @transform_3(%arg0: i32) -> (i32, i32) {
    %c0_i32 = arith.constant 0 : i32
    %c0_i32_0 = arith.constant 0 : i32
    %c0_i32_1 = arith.constant 0 : i32
    return %c0_i32, %c0_i32_0 : i32, i32
  }
  func.func @transform_4(%arg0: i32) -> (i32, i32) {
    %c0_i32 = arith.constant 0 : i32
    %c0_i32_0 = arith.constant 0 : i32
    %c0_i32_1 = arith.constant 0 : i32
    return %c0_i32, %c0_i32_0 : i32, i32
  }
  func.func @transform_5(%arg0: i32) -> (i32, i32) {
    %c0_i32 = arith.constant 0 : i32
    %c0_i32_0 = arith.constant 0 : i32
    %c0_i32_1 = arith.constant 0 : i32
    return %c0_i32, %c0_i32_0 : i32, i32
  }
  func.func @transform_6(%arg0: i32) -> (i32, i32) {
    %c0_i32 = arith.constant 0 : i32
    %c0_i32_0 = arith.constant 0 : i32
    %c0_i32_1 = arith.constant 0 : i32
    return %c0_i32, %c0_i32_0 : i32, i32
  }
  func.func @transform_7(%arg0: i32) -> (i32, i32) {
    %c0_i32 = arith.constant 0 : i32
    %c0_i32_0 = arith.constant 0 : i32
    %c0_i32_1 = arith.constant 0 : i32
    return %c0_i32, %c0_i32_0 : i32, i32
  }
  func.func @transform_8(%arg0: i32) -> (i32, i32) {
    %c0_i32 = arith.constant 0 : i32
    %c0_i32_0 = arith.constant 0 : i32
    %c0_i32_1 = arith.constant 0 : i32
    return %c0_i32, %c0_i32_0 : i32, i32
  }
  func.func @transform_9(%arg0: i32) -> (i32, i32) {
    %c0_i32 = arith.constant 0 : i32
    %c0_i32_0 = arith.constant 0 : i32
    %c0_i32_1 = arith.constant 0 : i32
    return %c0_i32, %c0_i32_0 : i32, i32
  }
  func.func @transform_10(%arg0: i32) -> (i32, i32) {
    %c0_i32 = arith.constant 0 : i32
    %c0_i32_0 = arith.constant 0 : i32
    %c0_i32_1 = arith.constant 0 : i32
    return %c0_i32, %c0_i32_0 : i32, i32
  }
  func.func @transform_11(%arg0: i32) -> (i32, i32) {
    %c0_i32 = arith.constant 0 : i32
    %c0_i32_0 = arith.constant 0 : i32
    %c0_i32_1 = arith.constant 0 : i32
    return %c0_i32, %c0_i32_0 : i32, i32
  }
  func.func @transform_12(%arg0: i32) -> (i32, i32) {
    %c0_i32 = arith.constant 0 : i32
    %c0_i32_0 = arith.constant 0 : i32
    %c0_i32_1 = arith.constant 0 : i32
    return %c0_i32, %c0_i32_0 : i32, i32
  }
  func.func @transform_13(%arg0: i32) -> (i32, i32) {
    %c0_i32 = arith.constant 0 : i32
    %c0_i32_0 = arith.constant 0 : i32
    %c0_i32_1 = arith.constant 0 : i32
    return %c0_i32, %c0_i32_0 : i32, i32
  }
  func.func @transform_14(%arg0: i32) -> (i32, i32) {
    %c0_i32 = arith.constant 0 : i32
    %c0_i32_0 = arith.constant 0 : i32
    %c0_i32_1 = arith.constant 0 : i32
    return %c0_i32, %c0_i32_0 : i32, i32
  }
  func.func @transform_15(%arg0: i32) -> (i32, i32) {
    %c0_i32 = arith.constant 0 : i32
    %c0_i32_0 = arith.constant 0 : i32
    return %arg0, %c0_i32 : i32, i32
  }
  func.func @transform_16(%arg0: i32) -> (i32, i32) {
    %c0_i32 = arith.constant 0 : i32
    %c0_i32_0 = arith.constant 0 : i32
    return %arg0, %c0_i32 : i32, i32
  }
}

</mosaic_0001>

<llo_original>
// kernel: fwd.1
$region0: #{fwd.1}
  #allocation0 [shape = 'u32[]', space=smem, size = 0x4, offset = 0x4, fixed_abs, tag = 'smem constant byte address 0x4 - core index']
  #allocation1 [shape = 'u32[72,128]{1,0:T(1,128)}', space=vmem, size = 0x9000, scoped, tag = 'internal scratch']
  #allocation2 [shape = 'f32[1]{0:T(128)S(6)}', space=smem, size = 0x200, scoped, tag = 'scoped memory for fwd.1']
  %s0 = inlined_call_operand.<no memory space> [shape: f32[1], index: 0, kind: input, shape index: {}]
  %s1 = inlined_call_operand.hbm [shape: f32[8,16], index: 1, kind: input, shape index: {}]
  %s2 = inlined_call_operand.hbm [shape: f32[8,16], index: 2, kind: input, shape index: {}]
  %s3 = inlined_call_operand.vmem [shape: f32[16,32], index: 3, kind: input, shape index: {}]
  %s4 = inlined_call_operand.vmem [shape: f32[32,16], index: 4, kind: input, shape index: {}]
  %s5 = inlined_call_operand.vmem [shape: f32[1,32], index: 5, kind: input, shape index: {}]
  %s6 = inlined_call_operand.vmem [shape: f32[1,32], index: 6, kind: input, shape index: {}]
  %s7 = inlined_call_operand.vmem [shape: f32[32,32], index: 7, kind: input, shape index: {}]
  %s8 = inlined_call_operand.vmem [shape: f32[32,32], index: 8, kind: input, shape index: {}]
  %s9 = inlined_call_operand.vmem [shape: f32[1,32], index: 9, kind: input, shape index: {}]
  %s10 = inlined_call_operand.vmem [shape: f32[1,32], index: 10, kind: input, shape index: {}]
  %s11 = inlined_call_operand.vmem [shape: f32[32,16], index: 11, kind: input, shape index: {}]
  %s12 = inlined_call_operand.hbm [shape: f32[16,32], index: 12, kind: input, shape index: {}]
  %s13 = inlined_call_operand.vmem [shape: f32[1,16], index: 13, kind: input, shape index: {}]
  %s14 = inlined_call_operand.vmem [shape: f32[1,16], index: 14, kind: input, shape index: {}]
  %s15 = inlined_call_operand.hbm [shape: f32[8,16], index: 15, kind: output, shape index: {0}]
  %s16 = inlined_call_operand.vmem [shape: f32[8,1], index: 16, kind: output, shape index: {1}]
  %17 = xla_tuple %s15, %s16
  %s18 = sld [smem:[#allocation0]]
  $region90: #{fwd.1} parent=0
    _
  %s20 = ssub.s32 1, %s18
  %s21 = scalar_select 0, %s20, %s18
  %22 = sst [smem:[#allocation2]] %s0
  $region1: #{fwd.1} parent=0
    #allocation3 [shape = 'u8[4096]{0}', space=vmem, size = 0x1000, scoped, tag = 'input window, operand 1, single buffered']
    #allocation4 [shape = 's32[1]{0}', space=sflag, size = 0x4, scoped, tag = 'scoped memory for fwd.1']
    #allocation5 [shape = 's32[1]{0}', space=sflag, size = 0x4, scoped, tag = 'scoped memory for fwd.1']
    #allocation6 [shape = 'u8[4096]{0}', space=vmem, size = 0x1000, scoped, tag = 'input window, operand 2, single buffered']
    #allocation7 [shape = 's32[1]{0}', space=sflag, size = 0x4, scoped, tag = 'scoped memory for fwd.1']
    #allocation8 [shape = 'u8[8192]{0}', space=vmem, size = 0x2000, scoped, tag = 'input window, operand 12, single buffered']
    #allocation9 [shape = 'u8[4096]{0}', space=vmem, size = 0x1000, scoped, tag = 'output window, operand 0, single buffered']
    %23 = vsyncpa [#allocation4], 0
    %24 = vsyncpa [#allocation7], 0
    %25 = vsyncpa [#allocation5], 0
    // Predicated region
    $region2: #{fwd.1} parent=1 // pred_check
      _
    $region3: #{fwd.1} parent=1 // pred_check_branch
      %27 = sbr.rel (0) target = $region5
    $region4: #{fwd.1} parent=1 // pred_region
      _
    $region5: #{fwd.1} parent=1 // pred_fallthru
      _
    // Predicated region
    $region6: #{fwd.1} parent=1 // pred_check
      _
    $region7: #{fwd.1} parent=1 // pred_check_branch
      %29 = sbr.rel (0) target = $region9
    $region8: #{fwd.1} parent=1 // pred_region
      %31 = vsyncadd [#allocation4], 0
      %s33 = sshll.u32 %s1, 4
      %s34 = int_to_ptr.hbm [resolvable:$true] %s33
      %s35 = sshll.u32 [#allocation3], 4
      %s36 = int_to_ptr.vmem [resolvable:$true] %s35
      %38 = dma.hbm_to_vmem [thread:$0]  %s34, 128, %s36, [#allocation4]
    $region9: #{fwd.1} parent=1 // pred_fallthru
      _
    // Predicated region
    $region10: #{fwd.1} parent=1 // pred_check
      _
    $region11: #{fwd.1} parent=1 // pred_check_branch
      %40 = sbr.rel (0) target = $region13
    $region12: #{fwd.1} parent=1 // pred_region
      %42 = vsyncadd [#allocation7], 0
      %s44 = sshll.u32 %s2, 4
      %s45 = int_to_ptr.hbm [resolvable:$true] %s44
      %s46 = sshll.u32 [#allocation6], 4
      %s47 = int_to_ptr.vmem [resolvable:$true] %s46
      %49 = dma.hbm_to_vmem [thread:$0]  %s45, 128, %s47, [#allocation7]
    $region13: #{fwd.1} parent=1 // pred_fallthru
      _
    // Predicated region
    $region14: #{fwd.1} parent=1 // pred_check
      _
    $region15: #{fwd.1} parent=1 // pred_check_branch
      %51 = sbr.rel (0) target = $region17
    $region16: #{fwd.1} parent=1 // pred_region
      _
    $region17: #{fwd.1} parent=1 // pred_fallthru
      _
    // Predicated region
    $region18: #{fwd.1} parent=1 // pred_check
      _
    $region19: #{fwd.1} parent=1 // pred_check_branch
      %53 = sbr.rel (0) target = $region21
    $region20: #{fwd.1} parent=1 // pred_region
      _
    $region21: #{fwd.1} parent=1 // pred_fallthru
      _
    // Predicated region
    $region22: #{fwd.1} parent=1 // pred_check
      _
    $region23: #{fwd.1} parent=1 // pred_check_branch
      %55 = sbr.rel (0) target = $region25
    $region24: #{fwd.1} parent=1 // pred_region
      _
    $region25: #{fwd.1} parent=1 // pred_fallthru
      _
    // Predicated region
    $region26: #{fwd.1} parent=1 // pred_check
      _
    $region27: #{fwd.1} parent=1 // pred_check_branch
      %57 = sbr.rel (0) target = $region29
    $region28: #{fwd.1} parent=1 // pred_region
      _
    $region29: #{fwd.1} parent=1 // pred_fallthru
      _
    // Predicated region
    $region30: #{fwd.1} parent=1 // pred_check
      _
    $region31: #{fwd.1} parent=1 // pred_check_branch
      %59 = sbr.rel (0) target = $region33
    $region32: #{fwd.1} parent=1 // pred_region
      _
    $region33: #{fwd.1} parent=1 // pred_fallthru
      _
    // Predicated region
    $region34: #{fwd.1} parent=1 // pred_check
      _
    $region35: #{fwd.1} parent=1 // pred_check_branch
      %61 = sbr.rel (0) target = $region37
    $region36: #{fwd.1} parent=1 // pred_region
      _
    $region37: #{fwd.1} parent=1 // pred_fallthru
      _
    // Predicated region
    $region38: #{fwd.1} parent=1 // pred_check
      _
    $region39: #{fwd.1} parent=1 // pred_check_branch
      %63 = sbr.rel (0) target = $region41
    $region40: #{fwd.1} parent=1 // pred_region
      _
    $region41: #{fwd.1} parent=1 // pred_fallthru
      _
    // Predicated region
    $region42: #{fwd.1} parent=1 // pred_check
      _
    $region43: #{fwd.1} parent=1 // pred_check_branch
      %65 = sbr.rel (0) target = $region45
    $region44: #{fwd.1} parent=1 // pred_region
      _
    $region45: #{fwd.1} parent=1 // pred_fallthru
      _
    // Predicated region
    $region46: #{fwd.1} parent=1 // pred_check
      _
    $region47: #{fwd.1} parent=1 // pred_check_branch
      %67 = sbr.rel (0) target = $region49
    $region48: #{fwd.1} parent=1 // pred_region
      _
    $region49: #{fwd.1} parent=1 // pred_fallthru
      _
    // Predicated region
    $region50: #{fwd.1} parent=1 // pred_check
      _
    $region51: #{fwd.1} parent=1 // pred_check_branch
      %69 = sbr.rel (0) target = $region53
    $region52: #{fwd.1} parent=1 // pred_region
      %71 = vsyncadd [#allocation7], 0
      %s72 = sshll.u32 %s12, 4
      %s73 = int_to_ptr.hbm [resolvable:$true] %s72
      %s74 = sshll.u32 [#allocation8], 4
      %s75 = int_to_ptr.vmem [resolvable:$true] %s74
      %80 = dma.hbm_to_vmem [thread:$0]  %s73, 256, %s75, [#allocation7], 128, 128, 8
    $region53: #{fwd.1} parent=1 // pred_fallthru
      _
    // Predicated region
    $region54: #{fwd.1} parent=1 // pred_check
      _
    $region55: #{fwd.1} parent=1 // pred_check_branch
      %82 = sbr.rel (0) target = $region57
    $region56: #{fwd.1} parent=1 // pred_region
      _
    $region57: #{fwd.1} parent=1 // pred_fallthru
      _
    // Predicated region
    $region58: #{fwd.1} parent=1 // pred_check
      _
    $region59: #{fwd.1} parent=1 // pred_check_branch
      %84 = sbr.rel (0) target = $region61
    $region60: #{fwd.1} parent=1 // pred_region
      _
    $region61: #{fwd.1} parent=1 // pred_fallthru
      _
    // Predicated region
    $region62: #{fwd.1} parent=1 // pred_check
      _
    $region63: #{fwd.1} parent=1 // pred_check_branch
      %86 = sbr.rel (0) target = $region65
    $region64: #{fwd.1} parent=1 // pred_region
      %88 = dma.done [#allocation4], 128
    $region65: #{fwd.1} parent=1 // pred_fallthru
      _
    // Predicated region
    $region66: #{fwd.1} parent=1 // pred_check
      _
    $region67: #{fwd.1} parent=1 // pred_check_branch
      %90 = sbr.rel (0) target = $region69
    $region68: #{fwd.1} parent=1 // pred_region
      %92 = dma.done [#allocation7], 128
    $region69: #{fwd.1} parent=1 // pred_fallthru
      _
    // Predicated region
    $region70: #{fwd.1} parent=1 // pred_check
      _
    $region71: #{fwd.1} parent=1 // pred_check_branch
      %94 = sbr.rel (0) target = $region73
    $region72: #{fwd.1} parent=1 // pred_region
      %96 = dma.done [#allocation7], 256
    $region73: #{fwd.1} parent=1 // pred_fallthru
      _
    %s97 = sld [smem:[#allocation2]]
    %v98 = vld [vmem:[%s6] sm:$0x1]
    %v99 = vld [vmem:[%s5] sm:$0x1]
    %v100 = vstv %s97
    %v101 = vmul.f32 %v100, %v99
    %v102 = vadd.f32 %v98, %v101
    %v103 = vld [vmem:[%s10] sm:$0x1]
    %v104 = vld [vmem:[%s9] sm:$0x1]
    %v105 = vmul.f32 %v100, %v104
    %v106 = vadd.f32 %v103, %v105
    %v107 = vld [vmem:[%s14] sm:$0x1]
    %v108 = vld [vmem:[%s13] sm:$0x1]
    %v109 = vmul.f32 %v100, %v108
    %v110 = vadd.f32 %v107, %v109
    %v111 = vld [vmem:[#allocation3] sm:$0xff]
    %v112 = vld [vmem:[%s3] sm:$0xff]
    %v113 = vld [vmem:[%s3 + $0x8] sm:$0xff]
    %v115 = vperm.slane %v102, 0
    %vm117 = vcmask 130048
    %v119 = vsel %vm117, %v111, 0
    %121 = vmatpush.msra.mxu0 0.0
    %122 = vmatpush.msra.mxu0 0.0
    %123 = vmatpush.msra.mxu0 0.0
    %124 = vmatpush.msra.mxu0 0.0
    %125 = vmatpush.msra.mxu0 0.0
    %126 = vmatpush.msra.mxu0 0.0
    %127 = vmatpush.msra.mxu0 0.0
    %128 = vmatpush.msra.mxu0 0.0
    %129 = vmatpush.msra.mxu0 0.0
    %130 = vmatpush.msra.mxu0 0.0
    %131 = vmatpush.msra.mxu0 0.0
    %132 = vmatpush.msra.mxu0 0.0
    %133 = vmatpush.msra.mxu0 0.0
    %134 = vmatpush.msra.mxu0 0.0
    %135 = vmatpush.msra.mxu0 %v113
    %136 = vmatpush.msra.mxu0 %v112
    %137 = vmatmul.f32.gmra.mxu0 %v119
    %v138 = vpop.f32.mrf.mxu0
    %v139 = vadd.f32 %v115, %v138
    %140 = vdwg.mxu0
    %v141 = vtanh.pop %v139
    %v142 = vld [vmem:[%s7] sm:$0xff]
    %v143 = vld [vmem:[%s7 + $0x8] sm:$0xff]
    %v144 = vld [vmem:[%s7 + $0x10] sm:$0xff]
    %v145 = vld [vmem:[%s7 + $0x18] sm:$0xff]
    %v147 = vperm.slane %v106, 0
    %vm149 = vcmask 261120
    %v151 = vsel %vm149, %v141, 0
    %153 = vmatpush.msra.mxu0 0.0
    %154 = vmatpush.msra.mxu0 0.0
    %155 = vmatpush.msra.mxu0 0.0
    %156 = vmatpush.msra.mxu0 0.0
    %157 = vmatpush.msra.mxu0 0.0
    %158 = vmatpush.msra.mxu0 0.0
    %159 = vmatpush.msra.mxu0 0.0
    %160 = vmatpush.msra.mxu0 0.0
    %161 = vmatpush.msra.mxu0 0.0
    %162 = vmatpush.msra.mxu0 0.0
    %163 = vmatpush.msra.mxu0 0.0
    %164 = vmatpush.msra.mxu0 0.0
    %165 = vmatpush.msra.mxu0 %v145
    %166 = vmatpush.msra.mxu0 %v144
    %167 = vmatpush.msra.mxu0 %v143
    %168 = vmatpush.msra.mxu0 %v142
    %169 = vmatmul.f32.gmra.mxu0 %v151
    %v170 = vpop.f32.mrf.mxu0
    %v171 = vadd.f32 %v147, %v170
    %172 = vdwg.mxu0
    %v173 = vtanh.pop %v171
    %v174 = vld [vmem:[%s11] sm:$0xff]
    %v175 = vld [vmem:[%s11 + $0x8] sm:$0xff]
    %v176 = vld [vmem:[%s11 + $0x10] sm:$0xff]
    %v177 = vld [vmem:[%s11 + $0x18] sm:$0xff]
    %v179 = vperm.slane %v110, 0
    %v182 = vsel %vm149, %v173, 0
    %184 = vmatpush.msra.mxu0 0.0
    %185 = vmatpush.msra.mxu0 0.0
    %186 = vmatpush.msra.mxu0 0.0
    %187 = vmatpush.msra.mxu0 0.0
    %188 = vmatpush.msra.mxu0 0.0
    %189 = vmatpush.msra.mxu0 0.0
    %190 = vmatpush.msra.mxu0 0.0
    %191 = vmatpush.msra.mxu0 0.0
    %192 = vmatpush.msra.mxu0 0.0
    %193 = vmatpush.msra.mxu0 0.0
    %194 = vmatpush.msra.mxu0 0.0
    %195 = vmatpush.msra.mxu0 0.0
    %196 = vmatpush.msra.mxu0 %v177
    %197 = vmatpush.msra.mxu0 %v176
    %198 = vmatpush.msra.mxu0 %v175
    %199 = vmatpush.msra.mxu0 %v174
    %200 = vmatmul.f32.gmra.mxu0 %v182
    %v201 = vpop.f32.mrf.mxu0
    %v202 = vadd.f32 %v179, %v201
    %203 = vdwg.mxu0
    %204 = vst.msk [vmem:[#allocation9] sm:$0xff] %vm117, %v202
    %v205 = vld [vmem:[#allocation6] sm:$0xff]
    %v206 = vld [vmem:[#allocation8] sm:$0xff]
    %v207 = vld [vmem:[#allocation8 + $0x8] sm:$0xff]
    %v209 = vsel %vm117, %v205, 0
    %211 = vmatpush.msra.mxu0 0.0
    %212 = vmatpush.msra.mxu0 0.0
    %213 = vmatpush.msra.mxu0 0.0
    %214 = vmatpush.msra.mxu0 0.0
    %215 = vmatpush.msra.mxu0 0.0
    %216 = vmatpush.msra.mxu0 0.0
    %217 = vmatpush.msra.mxu0 0.0
    %218 = vmatpush.msra.mxu0 0.0
    %219 = vmatpush.msra.mxu0 0.0
    %220 = vmatpush.msra.mxu0 0.0
    %221 = vmatpush.msra.mxu0 0.0
    %222 = vmatpush.msra.mxu0 0.0
    %223 = vmatpush.msra.mxu0 0.0
    %224 = vmatpush.msra.mxu0 0.0
    %225 = vmatpush.msra.mxu0 %v207
    %226 = vmatpush.msra.mxu0 %v206
    %227 = vmatmul.f32.gmra.mxu0 %v209
    %v228 = vpop.f32.mrf.mxu0
    %v229 = vadd.f32 0.0, %v228
    %230 = vdwg.mxu0
    %v231 = vmul.f32 %v173, %v173
    %v232 = vsub.f32 1.0, %v231
    %v233 = vmul.f32 %v229, %v232
    %v234 = vld [vmem:[%s8] sm:$0xff]
    %v235 = vld [vmem:[%s8 + $0x8] sm:$0xff]
    %v236 = vld [vmem:[%s8 + $0x10] sm:$0xff]
    %v237 = vld [vmem:[%s8 + $0x18] sm:$0xff]
    %v239 = vsel %vm149, %v233, 0
    %241 = vmatpush.msra.mxu0 0.0
    %242 = vmatpush.msra.mxu0 0.0
    %243 = vmatpush.msra.mxu0 0.0
    %244 = vmatpush.msra.mxu0 0.0
    %245 = vmatpush.msra.mxu0 0.0
    %246 = vmatpush.msra.mxu0 0.0
    %247 = vmatpush.msra.mxu0 0.0
    %248 = vmatpush.msra.mxu0 0.0
    %249 = vmatpush.msra.mxu0 0.0
    %250 = vmatpush.msra.mxu0 0.0
    %251 = vmatpush.msra.mxu0 0.0
    %252 = vmatpush.msra.mxu0 0.0
    %253 = vmatpush.msra.mxu0 %v237
    %254 = vmatpush.msra.mxu0 %v236
    %255 = vmatpush.msra.mxu0 %v235
    %256 = vmatpush.msra.mxu0 %v234
    %257 = vmatmul.f32.gmra.mxu0 %v239
    %v258 = vpop.f32.mrf.mxu0
    %v259 = vadd.f32 0.0, %v258
    %260 = vdwg.mxu0
    %v261 = vmul.f32 %v141, %v141
    %v262 = vsub.f32 1.0, %v261
    %v263 = vmul.f32 %v259, %v262
    %v264 = vld [vmem:[%s4] sm:$0xff]
    %v265 = vld [vmem:[%s4 + $0x8] sm:$0xff]
    %v266 = vld [vmem:[%s4 + $0x10] sm:$0xff]
    %v267 = vld [vmem:[%s4 + $0x18] sm:$0xff]
    %v269 = vsel %vm149, %v263, 0
    %271 = vmatpush.msra.mxu0 0.0
    %272 = vmatpush.msra.mxu0 0.0
    %273 = vmatpush.msra.mxu0 0.0
    %274 = vmatpush.msra.mxu0 0.0
    %275 = vmatpush.msra.mxu0 0.0
    %276 = vmatpush.msra.mxu0 0.0
    %277 = vmatpush.msra.mxu0 0.0
    %278 = vmatpush.msra.mxu0 0.0
    %279 = vmatpush.msra.mxu0 0.0
    %280 = vmatpush.msra.mxu0 0.0
    %281 = vmatpush.msra.mxu0 0.0
    %282 = vmatpush.msra.mxu0 0.0
    %283 = vmatpush.msra.mxu0 %v267
    %284 = vmatpush.msra.mxu0 %v266
    %285 = vmatpush.msra.mxu0 %v265
    %286 = vmatpush.msra.mxu0 %v264
    %287 = vmatmul.f32.gmra.mxu0 %v269
    %v288 = vpop.f32.mrf.mxu0
    %v289 = vadd.f32 0.0, %v288
    %290 = vdwg.mxu0
    %v291 = vmul.f32 %v289, %v205
    %v292 = vsel %vm117, %v291, 0.0
    %293 = vadd.xlane.f32.xlu0 %v292
    %v294 = vpop.xlane.xlu0 %293
    %vm295 = vcmask 7168
    %296 = vst.msk [vmem:[%s16] sm:$0xff] %vm295, %v294
    // Predicated region
    $region74: #{fwd.1} parent=1 // pred_check
      _
    $region75: #{fwd.1} parent=1 // pred_check_branch
      %298 = sbr.rel (0) target = $region77
    $region76: #{fwd.1} parent=1 // pred_region
      %300 = vsyncadd [#allocation5], 0
      %s302 = sshll.u32 [#allocation9], 4
      %s303 = int_to_ptr.vmem [resolvable:$true] %s302
      %s304 = sshll.u32 %s15, 4
      %s305 = int_to_ptr.hbm [resolvable:$true] %s304
      %307 = dma.vmem_to_hbm [thread:$0]  %s303, 128, %s305, [#allocation5]
    $region77: #{fwd.1} parent=1 // pred_fallthru
      _
    // Predicated region
    $region78: #{fwd.1} parent=1 // pred_check
      _
    $region79: #{fwd.1} parent=1 // pred_check_branch
      %309 = sbr.rel (0) target = $region81
    $region80: #{fwd.1} parent=1 // pred_region
      _
    $region81: #{fwd.1} parent=1 // pred_fallthru
      _
    // Predicated region
    $region82: #{fwd.1} parent=1 // pred_check
      _
    $region83: #{fwd.1} parent=1 // pred_check_branch
      %311 = sbr.rel (0) target = $region85
    $region84: #{fwd.1} parent=1 // pred_region
      %313 = dma.done [#allocation5], 128
    $region85: #{fwd.1} parent=1 // pred_fallthru
      _
    // Predicated region
    $region86: #{fwd.1} parent=1 // pred_check
      _
    $region87: #{fwd.1} parent=1 // pred_check_branch
      %315 = sbr.rel (0) target = $region89
    $region88: #{fwd.1} parent=1 // pred_region
      _
    $region89: #{fwd.1} parent=1 // pred_fallthru
      _
    %316 = vsyncpa [#allocation4], 1
    %317 = vsyncpa [#allocation7], 1
    %318 = vsyncpa [#allocation5], 1

</llo_original>
